<compile_context>
chip_gen: v5e
topology: v5e:2x2
jax: 0.10.0
libtpu: 0.0.40
codegen_flags: <defaults>
</compile_context>

<pallas_src>
import functools

import jax
import jax.numpy as jnp
from jax import lax
from jax.experimental import pallas as pl
from jax.experimental.pallas import tpu as pltpu


def _confusion_kernel(logits_ref, target_ref, out_ref,
                      iota_ref, tp_acc, p_acc, t_acc,
                      *, hw, needs_mask):
    # logits_ref: (C, TN)        target_ref: (1, TN) int32   out_ref: (C, 3) int32
    # iota_ref:   (C, TN) int32  scratch (hoisted class-index iota)
    # *_acc:      (C, 1)  int32  scratch accumulators (re-initialized per batch)
    i = pl.program_id(1)

    @pl.when(i == 0)
    def _init():
        iota_ref[...] = lax.broadcasted_iota(jnp.int32, iota_ref.shape, 0)
        tp_acc[...] = jnp.zeros_like(tp_acc)
        p_acc[...] = jnp.zeros_like(p_acc)
        t_acc[...] = jnp.zeros_like(t_acc)

    logits = logits_ref[...]                        # (C, TN)
    target = target_ref[...]                        # (1, TN)
    labels = iota_ref[...]                          # (C, TN)
    C, TN = logits.shape

    # argmax over the class (sublane) axis with first-occurrence tie breaking,
    # built from max/min reductions (well-supported cross-sublane ops).
    maxv = jnp.max(logits, axis=0, keepdims=True)   # (1, TN)
    idx_cand = jnp.where(logits == maxv, labels, jnp.int32(C))
    pred = jnp.min(idx_cand, axis=0, keepdims=True)  # (1, TN)

    P = pred == labels                              # one-hot pred   (C, TN) bool
    T = target == labels                            # one-hot target (C, TN) bool
    if needs_mask:                                  # compile-time branch only
        lane = lax.broadcasted_iota(jnp.int32, (1, TN), 1)
        valid = (i * TN + lane) < hw
        P = jnp.logical_and(P, valid)
        T = jnp.logical_and(T, valid)
    PT = jnp.logical_and(P, T)

    # Per-tile sums are exact in f32 (TN << 2^24); accumulate in int32.
    tp_acc[...] += jnp.sum(PT.astype(jnp.float32), axis=-1,
                           keepdims=True).astype(jnp.int32)
    p_acc[...] += jnp.sum(P.astype(jnp.float32), axis=-1,
                          keepdims=True).astype(jnp.int32)
    t_acc[...] += jnp.sum(T.astype(jnp.float32), axis=-1,
                          keepdims=True).astype(jnp.int32)

    @pl.when(i == pl.num_programs(1) - 1)
    def _finalize():
        out_ref[...] = jnp.concatenate(
            [tp_acc[...], p_acc[...], t_acc[...]], axis=-1)


def _pick_tile(hw, cap):
    """Largest lane tile: prefer a multiple of 128 that divides hw (no tail mask)."""
    if hw <= cap:
        return hw, False                   # full-extent block is always legal
    t = cap - cap % 128
    while t >= 128:
        if hw % t == 0:
            return t, False
        t -= 128
    return max(128, cap - cap % 128), True  # fall back to a masked tail


def confusion_matrix(logits_nchw, target_nhw, nlabels=5, tile_cap=32768):
    """Equivalent of ConfusionMatrix.forward for nlabels > 1 (argmax path).

    Returns the (nlabels, 4) float32 matrix with columns [tp, tn, fp, fn].
    """
    B, C, H, W = logits_nchw.shape
    assert C == nlabels and nlabels > 1, "class axis must match nlabels (>1)"
    HW = H * W

    # Native layout, free reshapes only (no transpose, no pad, no dtype force on logits).
    logits = logits_nchw.reshape(B, C, HW)
    target = target_nhw.reshape(B, 1, HW).astype(jnp.int32)

    tile, needs_mask = _pick_tile(HW, tile_cap)
    assert tile <= (1 << 24), "per-tile f32 sums must stay exact"
    n_tiles = pl.cdiv(HW, tile)

    kernel = functools.partial(_confusion_kernel, hw=HW, needs_mask=needs_mask)

    # Scoped-VMEM budget: double-buffered input blocks + iota scratch + live temps.
    itemsize = jnp.dtype(logits.dtype).itemsize
    est = (2 * (C * itemsize + 4) * tile        # double-buffered logits/target blocks
           + 4 * C * tile                       # hoisted iota scratch
           + 8 * max(C, 8) * tile * 4           # (C, tile)-sized elementwise temporaries
           + (2 << 20))
    vmem_limit = int(min(56 * 2**20, max(24 * 2**20, est)))

    cost = pl.CostEstimate(
        flops=10 * B * C * HW,
        transcendentals=0,
        bytes_accessed=B * C * HW * itemsize + B * HW * 4 + B * nlabels * 3 * 4)

    parts = pl.pallas_call(
        kernel,
        out_shape=jax.ShapeDtypeStruct((B, nlabels, 3), jnp.int32),
        grid_spec=pltpu.PrefetchScalarGridSpec(
            num_scalar_prefetch=0,
            grid=(B, n_tiles),
            in_specs=[
                pl.BlockSpec((None, C, tile), lambda b, i: (b, 0, i)),
                pl.BlockSpec((None, 1, tile), lambda b, i: (b, 0, i)),
            ],
            out_specs=pl.BlockSpec((None, nlabels, 3), lambda b, i: (b, 0, 0)),
            scratch_shapes=[
                pltpu.VMEM((C, tile), jnp.int32),     # hoisted class-index iota
                pltpu.VMEM((nlabels, 1), jnp.int32),  # tp accumulator
                pltpu.VMEM((nlabels, 1), jnp.int32),  # pred-count accumulator
                pltpu.VMEM((nlabels, 1), jnp.int32),  # target-count accumulator
            ],
        ),
        compiler_params=pltpu.CompilerParams(
            dimension_semantics=("parallel", "arbitrary"),
            vmem_limit_bytes=vmem_limit),
        cost_estimate=cost,
    )(logits, target)

    # Tiny epilogue in plain JAX: combine per-batch partials into the final cm.
    totals = parts.sum(axis=0).astype(jnp.float32)   # (nlabels, 3)
    tp = totals[:, 0]
    fp = totals[:, 1] - tp
    fn = totals[:, 2] - tp
    tn = jnp.float32(B * HW) - tp - fp - fn
    return jnp.stack([tp, tn, fp, fn], axis=-1)      # (nlabels, 4) float32


def _reference(logits_nchw, target_nhw, nlabels):
    pred = jnp.argmax(logits_nchw, axis=1).reshape(-1)
    tgt = target_nhw.reshape(-1)
    rows = []
    for l in range(nlabels):
        p = (pred == l).astype(jnp.float32)
        t = (tgt == l).astype(jnp.float32)
        cmv = p * 2 - t
        rows.append(jnp.stack([
            jnp.sum(cmv == 1).astype(jnp.float32),
            jnp.sum(cmv == 0).astype(jnp.float32),
            jnp.sum(cmv == 2).astype(jnp.float32),
            jnp.sum(cmv == -1).astype(jnp.float32),
        ]))
    return jnp.stack(rows)


if __name__ == "__main__":
    key = jax.random.PRNGKey(0)
    k1, k2 = jax.random.split(key)
    B, C, H, W = 2, 5, 16, 16
    logits = jax.random.normal(k1, (B, C, H, W), dtype=jnp.float32)
    target = jax.random.randint(k2, (B, H, W), 0, C, dtype=jnp.int32)

    cm = confusion_matrix(logits, target, nlabels=C)
    jax.block_until_ready(cm)

    ref = _reference(logits, target, C)
    assert cm.shape == (C, 4) and cm.dtype == jnp.float32
    assert jnp.allclose(cm, ref), (cm, ref)
    print("KERNEL_OK")
</pallas_src>

<mosaic_0001>
module attributes {stable_mosaic.version = 11 : i64} {
  func.func @_confusion_kernel(%arg0: i32, %arg1: i32, %arg2: memref<1x5x256xf32, #tpu.memory_space<vmem>>, %arg3: memref<1x1x256xi32, #tpu.memory_space<vmem>>, %arg4: memref<1x5x3xi32, #tpu.memory_space<vmem>>, %arg5: memref<5x256xi32, #tpu.memory_space<vmem>>, %arg6: memref<5x1xi32, #tpu.memory_space<vmem>>, %arg7: memref<5x1xi32, #tpu.memory_space<vmem>>, %arg8: memref<5x1xi32, #tpu.memory_space<vmem>>) attributes {dimension_semantics = [#tpu.dimension_semantics<parallel>, #tpu.dimension_semantics<arbitrary>], iteration_bounds = array<i64: 2, 1>, scalar_prefetch = 0 : i64, scratch_operands = 4 : i64, tpu.core_type = #tpu.core_type<tc>, window_params = [{transform_indices = @transform_0, window_bounds = array<i64: 1, 5, 256>}, {transform_indices = @transform_1, window_bounds = array<i64: 1, 1, 256>}, {transform_indices = @transform_2, window_bounds = array<i64: 1, 5, 3>}]} {
    %c0_i32 = arith.constant 0 : i32
    %0 = arith.cmpi eq, %arg1, %c0_i32 : i32
    %1 = arith.extui %0 : i1 to i32
    %c0_i32_0 = arith.constant 0 : i32
    %2 = arith.cmpi ne, %1, %c0_i32_0 : i32
    scf.if %2 {
      %48 = tpu.iota {dimensions = array<i32: 0>} : vector<5x256xi32>
      %c0_26 = arith.constant 0 : index
      %c0_27 = arith.constant 0 : index
      %49 = vector.load %arg5[%c0_26, %c0_27] : memref<5x256xi32, #tpu.memory_space<vmem>>, vector<5x256xi32>
      tpu.vector_store %arg5[%c0_26, %c0_27], %48 {strides = array<i32>} : memref<5x256xi32, #tpu.memory_space<vmem>>, vector<5x256xi32>,
      %c0_i32_28 = arith.constant 0 : i32
      %50 = vector.broadcast %c0_i32_28 : i32 to vector<5x1xi32>
      %c0_29 = arith.constant 0 : index
      %c0_30 = arith.constant 0 : index
      %51 = vector.load %arg6[%c0_29, %c0_30] : memref<5x1xi32, #tpu.memory_space<vmem>>, vector<5x1xi32>
      tpu.vector_store %arg6[%c0_29, %c0_30], %50 {strides = array<i32>} : memref<5x1xi32, #tpu.memory_space<vmem>>, vector<5x1xi32>,
      %c0_i32_31 = arith.constant 0 : i32
      %52 = vector.broadcast %c0_i32_31 : i32 to vector<5x1xi32>
      %c0_32 = arith.constant 0 : index
      %c0_33 = arith.constant 0 : index
      %53 = vector.load %arg7[%c0_32, %c0_33] : memref<5x1xi32, #tpu.memory_space<vmem>>, vector<5x1xi32>
      tpu.vector_store %arg7[%c0_32, %c0_33], %52 {strides = array<i32>} : memref<5x1xi32, #tpu.memory_space<vmem>>, vector<5x1xi32>,
      %c0_i32_34 = arith.constant 0 : i32
      %54 = vector.broadcast %c0_i32_34 : i32 to vector<5x1xi32>
      %c0_35 = arith.constant 0 : index
      %c0_36 = arith.constant 0 : index
      %55 = vector.load %arg8[%c0_35, %c0_36] : memref<5x1xi32, #tpu.memory_space<vmem>>, vector<5x1xi32>
      tpu.vector_store %arg8[%c0_35, %c0_36], %54 {strides = array<i32>} : memref<5x1xi32, #tpu.memory_space<vmem>>, vector<5x1xi32>,
    } else {
    }
    %c0 = arith.constant 0 : index
    %c0_1 = arith.constant 0 : index
    %c0_2 = arith.constant 0 : index
    %3 = vector.load %arg2[%c0, %c0_1, %c0_2] : memref<1x5x256xf32, #tpu.memory_space<vmem>>, vector<1x5x256xf32>
    %4 = vector.shape_cast %3 : vector<1x5x256xf32> to vector<5x256xf32>
    %c0_3 = arith.constant 0 : index
    %c0_4 = arith.constant 0 : index
    %c0_5 = arith.constant 0 : index
    %5 = vector.load %arg3[%c0_3, %c0_4, %c0_5] : memref<1x1x256xi32, #tpu.memory_space<vmem>>, vector<1x1x256xi32>
    %6 = vector.shape_cast %5 : vector<1x1x256xi32> to vector<1x256xi32>
    %c0_6 = arith.constant 0 : index
    %c0_7 = arith.constant 0 : index
    %7 = vector.load %arg5[%c0_6, %c0_7] : memref<5x256xi32, #tpu.memory_space<vmem>>, vector<5x256xi32>
    %cst = arith.constant dense<0xFF800000> : vector<256xf32>
    %8 = vector.multi_reduction <maximumf>, %4, %cst [0] : vector<5x256xf32> to vector<256xf32>
    %9 = vector.shape_cast %8 : vector<256xf32> to vector<1x256xf32>
    %10 = vector.broadcast %9 : vector<1x256xf32> to vector<5x256xf32>
    %11 = arith.cmpf oeq, %4, %10 : vector<5x256xf32>
    %c5_i32 = arith.constant 5 : i32
    %12 = vector.broadcast %c5_i32 : i32 to vector<5x256xi32>
    %13 = arith.select %11, %7, %12 : vector<5x256xi1>, vector<5x256xi32>
    %cst_8 = arith.constant dense<2147483647> : vector<256xi32>
    %14 = vector.multi_reduction <minsi>, %13, %cst_8 [0] : vector<5x256xi32> to vector<256xi32>
    %15 = vector.shape_cast %14 : vector<256xi32> to vector<1x256xi32>
    %16 = vector.broadcast %15 : vector<1x256xi32> to vector<5x256xi32>
    %17 = arith.cmpi eq, %16, %7 : vector<5x256xi32>
    %18 = vector.broadcast %6 : vector<1x256xi32> to vector<5x256xi32>
    %19 = arith.cmpi eq, %18, %7 : vector<5x256xi32>
    %20 = arith.andi %17, %19 : vector<5x256xi1>
    %c0_9 = arith.constant 0 : index
    %c0_10 = arith.constant 0 : index
    %21 = vector.load %arg6[%c0_9, %c0_10] : memref<5x1xi32, #tpu.memory_space<vmem>>, vector<5x1xi32>
    %22 = arith.extui %20 : vector<5x256xi1> to vector<5x256xi32>
    %23 = arith.sitofp %22 : vector<5x256xi32> to vector<5x256xf32>
    %cst_11 = arith.constant dense<0.000000e+00> : vector<5xf32>
    %24 = vector.multi_reduction <add>, %23, %cst_11 [1] : vector<5x256xf32> to vector<5xf32>
    %25 = vector.shape_cast %24 : vector<5xf32> to vector<5x1xf32>
    %26 = arith.fptosi %25 : vector<5x1xf32> to vector<5x1xi32>
    %27 = arith.addi %21, %26 : vector<5x1xi32>
    %c0_12 = arith.constant 0 : index
    %c0_13 = arith.constant 0 : index
    %28 = vector.load %arg6[%c0_12, %c0_13] : memref<5x1xi32, #tpu.memory_space<vmem>>, vector<5x1xi32>
    tpu.vector_store %arg6[%c0_12, %c0_13], %27 {strides = array<i32>} : memref<5x1xi32, #tpu.memory_space<vmem>>, vector<5x1xi32>,
    %c0_14 = arith.constant 0 : index
    %c0_15 = arith.constant 0 : index
    %29 = vector.load %arg7[%c0_14, %c0_15] : memref<5x1xi32, #tpu.memory_space<vmem>>, vector<5x1xi32>
    %30 = arith.extui %17 : vector<5x256xi1> to vector<5x256xi32>
    %31 = arith.sitofp %30 : vector<5x256xi32> to vector<5x256xf32>
    %cst_16 = arith.constant dense<0.000000e+00> : vector<5xf32>
    %32 = vector.multi_reduction <add>, %31, %cst_16 [1] : vector<5x256xf32> to vector<5xf32>
    %33 = vector.shape_cast %32 : vector<5xf32> to vector<5x1xf32>
    %34 = arith.fptosi %33 : vector<5x1xf32> to vector<5x1xi32>
    %35 = arith.addi %29, %34 : vector<5x1xi32>
    %c0_17 = arith.constant 0 : index
    %c0_18 = arith.constant 0 : index
    %36 = vector.load %arg7[%c0_17, %c0_18] : memref<5x1xi32, #tpu.memory_space<vmem>>, vector<5x1xi32>
    tpu.vector_store %arg7[%c0_17, %c0_18], %35 {strides = array<i32>} : memref<5x1xi32, #tpu.memory_space<vmem>>, vector<5x1xi32>,
    %c0_19 = arith.constant 0 : index
    %c0_20 = arith.constant 0 : index
    %37 = vector.load %arg8[%c0_19, %c0_20] : memref<5x1xi32, #tpu.memory_space<vmem>>, vector<5x1xi32>
    %38 = arith.extui %19 : vector<5x256xi1> to vector<5x256xi32>
    %39 = arith.sitofp %38 : vector<5x256xi32> to vector<5x256xf32>
    %cst_21 = arith.constant dense<0.000000e+00> : vector<5xf32>
    %40 = vector.multi_reduction <add>, %39, %cst_21 [1] : vector<5x256xf32> to vector<5xf32>
    %41 = vector.shape_cast %40 : vector<5xf32> to vector<5x1xf32>
    %42 = arith.fptosi %41 : vector<5x1xf32> to vector<5x1xi32>
    %43 = arith.addi %37, %42 : vector<5x1xi32>
    %c0_22 = arith.constant 0 : index
    %c0_23 = arith.constant 0 : index
    %44 = vector.load %arg8[%c0_22, %c0_23] : memref<5x1xi32, #tpu.memory_space<vmem>>, vector<5x1xi32>
    tpu.vector_store %arg8[%c0_22, %c0_23], %43 {strides = array<i32>} : memref<5x1xi32, #tpu.memory_space<vmem>>, vector<5x1xi32>,
    %c0_i32_24 = arith.constant 0 : i32
    %45 = arith.cmpi eq, %arg1, %c0_i32_24 : i32
    %46 = arith.extui %45 : i1 to i32
    %c0_i32_25 = arith.constant 0 : i32
    %47 = arith.cmpi ne, %46, %c0_i32_25 : i32
    scf.if %47 {
      %c0_26 = arith.constant 0 : index
      %c0_27 = arith.constant 0 : index
      %48 = vector.load %arg6[%c0_26, %c0_27] : memref<5x1xi32, #tpu.memory_space<vmem>>, vector<5x1xi32>
      %c0_28 = arith.constant 0 : index
      %c0_29 = arith.constant 0 : index
      %49 = vector.load %arg7[%c0_28, %c0_29] : memref<5x1xi32, #tpu.memory_space<vmem>>, vector<5x1xi32>
      %c0_30 = arith.constant 0 : index
      %c0_31 = arith.constant 0 : index
      %50 = vector.load %arg8[%c0_30, %c0_31] : memref<5x1xi32, #tpu.memory_space<vmem>>, vector<5x1xi32>
      %51 = tpu.concatenate %48, %49, %50 in 1 : vector<5x1xi32>, vector<5x1xi32>, vector<5x1xi32> -> vector<5x3xi32>
      %c0_32 = arith.constant 0 : index
      %c0_33 = arith.constant 0 : index
      %c0_34 = arith.constant 0 : index
      %52 = vector.load %arg4[%c0_32, %c0_33, %c0_34] : memref<1x5x3xi32, #tpu.memory_space<vmem>>, vector<1x5x3xi32>
      %53 = vector.shape_cast %52 : vector<1x5x3xi32> to vector<5x3xi32>
      %54 = vector.shape_cast %51 : vector<5x3xi32> to vector<1x5x3xi32>
      tpu.vector_store %arg4[%c0_32, %c0_33, %c0_34], %54 {strides = array<i32>} : memref<1x5x3xi32, #tpu.memory_space<vmem>>, vector<1x5x3xi32>,
    } else {
    }
    return
  }
  func.func @transform_0(%arg0: i32, %arg1: i32) -> (i32, i32, i32) {
    %c0_i32 = arith.constant 0 : i32
    %c0_i32_0 = arith.constant 0 : i32
    return %arg0, %c0_i32, %arg1 : i32, i32, i32
  }
  func.func @transform_1(%arg0: i32, %arg1: i32) -> (i32, i32, i32) {
    %c0_i32 = arith.constant 0 : i32
    %c0_i32_0 = arith.constant 0 : i32
    return %arg0, %c0_i32, %arg1 : i32, i32, i32
  }
  func.func @transform_2(%arg0: i32, %arg1: i32) -> (i32, i32, i32) {
    %c0_i32 = arith.constant 0 : i32
    %c0_i32_0 = arith.constant 0 : i32
    %c0_i32_1 = arith.constant 0 : i32
    return %arg0, %c0_i32, %c0_i32_0 : i32, i32, i32
  }
}

</mosaic_0001>

<llo_original>
// kernel: tpu_custom_call.1
$region0: #{tpu_custom_call.1}
  #allocation0 [shape = 'u32[]', space=smem, size = 0x4, offset = 0x4, fixed_abs, tag = 'smem constant byte address 0x4 - core index']
  #allocation1 [shape = 'u32[72,128]{1,0:T(1,128)}', space=vmem, size = 0x9000, scoped, tag = 'internal scratch']
  #allocation2 [shape = 's32[5,256]{1,0:T(8,128)}', space=vmem, size = 0x2000, scoped, tag = 'scratch operand']
  #allocation3 [shape = 's32[5,1]{1,0:T(8,128)}', space=vmem, size = 0x1000, scoped, tag = 'scratch operand']
  #allocation4 [shape = 's32[5,1]{1,0:T(8,128)}', space=vmem, size = 0x1000, scoped, tag = 'scratch operand']
  #allocation5 [shape = 's32[5,1]{1,0:T(8,128)}', space=vmem, size = 0x1000, scoped, tag = 'scratch operand']
  %s0 = inlined_call_operand.vmem [shape: f32[2,5,256], index: 0, kind: input, shape index: {}]
  %s1 = inlined_call_operand.vmem [shape: s32[2,1,256], index: 1, kind: input, shape index: {}]
  %s2 = inlined_call_operand.vmem [shape: s32[2,5,3], index: 2, kind: output, shape index: {}]
  %s3 = sld [smem:[#allocation0]]
  $region49: #{tpu_custom_call.1} parent=0
    _
  %s5 = ssub.s32 1, %s3
  %s6 = scalar_select 0, %s5, %s3
  loop: start=0, step=1, limit=4
  $region2: #{tpu_custom_call.1} parent=0 // loop_pre_header
    _
  $region3: #{tpu_custom_call.1} parent=0 // loop_header
    %s8 = sphi 0, %s12
    %p9 = scmp.ge.s32.totalorder %s8, 4
    %s15 = sphi 0, %s27
    %s16 = sphi 0, %s23
    %s17 = sphi 0, %s15
    %s18 = sphi 0, %s16
    %s19 = sphi 0, %s17
    %s20 = sphi 0, %s18
    %s32 = sphi 0, %s34
    %s35 = sphi 0, %s32
    %s36 = sphi 0, %s35
    %s52 = sphi 0, %s36
    %s60 = sphi 0, %s62
    %s63 = sphi 0, %s60
    %s64 = sphi 0, %s63
    %s80 = sphi 0, %s64
    %s86 = sphi 0, %s88
    %s89 = sphi 0, %s86
    %s90 = sphi 0, %s89
    %s106 = sphi 0, %s90
  $region4: #{tpu_custom_call.1} parent=0 // loop_header_branch
    %11 = sbr.rel (%p9) target = $region8
  $region5: #{tpu_custom_call.1} parent=0 // loop_body
    %s13 = ssub.s32 %s8, 1
    %s14 = ssub.s32 %s8, 2
    %s21 = sadd.s32 1, %s16
    %p22 = scmp.ge.s32.totalorder %s21, 1
    %s23 = scalar_select %p22, 0, %s21
    %s24 = sadd.s32 1, %s15
    %s25 = scalar_select %p22, %s24, %s15
    %p26 = scmp.ge.s32.totalorder %s25, 2
    %s27 = scalar_select %p26, 0, %s25
    %s28 = ssub.s32 %s15, %s27
    %s29 = ssub.s32 %s16, %s23
    %s30 = sor.u32 %s28, %s29
    %p31 = scmp.eq.s32.totalorder %s30, 0
    %s33 = sadd.s32 %s32, 1
    %s34 = scalar_select %p31, %s32, %s33
    %p37 = pneg %p31
    %p38 = scmp.eq.s32.totalorder %s8, 1
    %p39 = por %p37, %p38
    %p40 = scmp.ne.s32.totalorder %s32, %s35
    %p41 = scmp.eq.s32.totalorder %s8, 0
    %p42 = por %p40, %p41
    %p43 = scmp.ne.s32.totalorder %s32, %s35
    %p44 = scmp.eq.s32.totalorder %s13, 1
    %p45 = por %p43, %p44
    %p46 = scmp.ne.s32.totalorder %s35, %s36
    %p47 = scmp.eq.s32.totalorder %s13, 0
    %p48 = por %p46, %p47
    %p49 = scmp.ne.s32.totalorder %s35, %s36
    %p50 = scmp.eq.s32.totalorder %s14, 1
    %p51 = por %p49, %p50
    %p53 = scmp.ne.s32.totalorder %s36, %s52
    %p54 = scmp.eq.s32.totalorder %s14, 0
    %p55 = por %p53, %p54
    %s56 = ssub.s32 %s15, %s27
    %s57 = ssub.s32 %s16, %s23
    %s58 = sor.u32 %s56, %s57
    %p59 = scmp.eq.s32.totalorder %s58, 0
    %s61 = sadd.s32 %s60, 1
    %s62 = scalar_select %p59, %s60, %s61
    %p65 = pneg %p59
    %p66 = scmp.eq.s32.totalorder %s8, 1
    %p67 = por %p65, %p66
    %p68 = scmp.ne.s32.totalorder %s60, %s63
    %p69 = scmp.eq.s32.totalorder %s8, 0
    %p70 = por %p68, %p69
    %p71 = scmp.ne.s32.totalorder %s60, %s63
    %p72 = scmp.eq.s32.totalorder %s13, 1
    %p73 = por %p71, %p72
    %p74 = scmp.ne.s32.totalorder %s63, %s64
    %p75 = scmp.eq.s32.totalorder %s13, 0
    %p76 = por %p74, %p75
    %p77 = scmp.ne.s32.totalorder %s63, %s64
    %p78 = scmp.eq.s32.totalorder %s14, 1
    %p79 = por %p77, %p78
    %p81 = scmp.ne.s32.totalorder %s64, %s80
    %p82 = scmp.eq.s32.totalorder %s14, 0
    %p83 = por %p81, %p82
    %s84 = ssub.s32 %s15, %s27
    %p85 = scmp.eq.s32.totalorder %s84, 0
    %s87 = sadd.s32 %s86, 1
    %s88 = scalar_select %p85, %s86, %s87
    %p91 = pneg %p85
    %p92 = scmp.eq.s32.totalorder %s8, 1
    %p93 = por %p91, %p92
    %p94 = scmp.ne.s32.totalorder %s86, %s89
    %p95 = scmp.eq.s32.totalorder %s8, 0
    %p96 = por %p94, %p95
    %p97 = scmp.ne.s32.totalorder %s86, %s89
    %p98 = scmp.eq.s32.totalorder %s13, 1
    %p99 = por %p97, %p98
    %p100 = scmp.ne.s32.totalorder %s89, %s90
    %p101 = scmp.eq.s32.totalorder %s13, 0
    %p102 = por %p100, %p101
    %p103 = scmp.ne.s32.totalorder %s89, %s90
    %p104 = scmp.eq.s32.totalorder %s14, 1
    %p105 = por %p103, %p104
    %p107 = scmp.ne.s32.totalorder %s90, %s106
    %p108 = scmp.eq.s32.totalorder %s14, 0
    %p109 = por %p107, %p108
    %p110 = scmp.le.s32.totalorder 1, %s8
    %p111 = scmp.lt.s32.totalorder %s8, 3
    %p112 = pnand %p110, %p111
    %p113 = pneg %p112
    // Predicated region
    $region9: #{tpu_custom_call.1} parent=5 // pred_check
      _
    $region10: #{tpu_custom_call.1} parent=5 // pred_check_branch
      %115 = sbr.rel (%p112) target = $region12
    $region11: #{tpu_custom_call.1} parent=5 // pred_region
      %s116 = ssub.s32 %s8, 1
    $region12: #{tpu_custom_call.1} parent=5 // pred_fallthru
      _
    %p117 = scmp.lt.s32.totalorder %s8, 2
    // Predicated region
    $region13: #{tpu_custom_call.1} parent=5 // pred_check
      %p118 = pneg %p117
    $region14: #{tpu_custom_call.1} parent=5 // pred_check_branch
      %120 = sbr.rel (%p118) target = $region16
    $region15: #{tpu_custom_call.1} parent=5 // pred_region
      // Predicated region
      $region17: #{tpu_custom_call.1} parent=15 // pred_check
        %p121 = pneg %p42
      $region18: #{tpu_custom_call.1} parent=15 // pred_check_branch
        %123 = sbr.rel (%p121) target = $region20
      $region19: #{tpu_custom_call.1} parent=15 // pred_region
        %s124 = smul.u32 2, %s16
        %p125 = scmp.lt.s32.totalorder %s15, 1
        %s126 = scalar_select %p125, %s15, 1
        %p127 = scmp.lt.s32.totalorder %s124, 1
        %s128 = scalar_select %p127, %s124, 1
        %s129 = smul.addr %s126, 2
        %s130 = sadd.s32 %s128, %s129
        %s131 = smul.addr %s130, 8
        %s132 = scalar_lea.vmem %s0, %s131
        %s133 = smul.u32 2, %s16
      $region20: #{tpu_custom_call.1} parent=15 // pred_fallthru
        _
      // Predicated region
      $region21: #{tpu_custom_call.1} parent=15 // pred_check
        %p134 = pneg %p70
      $region22: #{tpu_custom_call.1} parent=15 // pred_check_branch
        %136 = sbr.rel (%p134) target = $region24
      $region23: #{tpu_custom_call.1} parent=15 // pred_region
        %s137 = smul.u32 2, %s16
        %p138 = scmp.lt.s32.totalorder %s15, 1
        %s139 = scalar_select %p138, %s15, 1
        %p140 = scmp.lt.s32.totalorder %s137, 1
        %s141 = scalar_select %p140, %s137, 1
        %s142 = smul.addr %s139, 2
        %s143 = sadd.s32 %s141, %s142
        %s144 = scalar_lea.vmem %s1, %s143
        %s145 = smul.u32 2, %s16
      $region24: #{tpu_custom_call.1} parent=15 // pred_fallthru
        _
    $region16: #{tpu_custom_call.1} parent=5 // pred_fallthru
      _
    %p146 = scmp.le.s32.totalorder 1, %s8
    %p147 = scmp.lt.s32.totalorder %s8, 3
    %p148 = pnand %p146, %p147
    %p149 = pneg %p148
    // Predicated region
    $region25: #{tpu_custom_call.1} parent=5 // pred_check
      _
    $region26: #{tpu_custom_call.1} parent=5 // pred_check_branch
      %151 = sbr.rel (%p148) target = $region28
    $region27: #{tpu_custom_call.1} parent=5 // pred_region
      %s152 = ssub.s32 %s8, 1
      %s153 = smul.u32 2, %s18
      %p154 = scmp.lt.s32.totalorder %s17, 1
      %s155 = scalar_select %p154, %s17, 1
      %p156 = scmp.lt.s32.totalorder %s153, 1
      %s157 = scalar_select %p156, %s153, 1
      %s158 = smul.addr %s155, 2
      %s159 = sadd.s32 %s157, %s158
      %s160 = smul.addr %s159, 8
      %s161 = scalar_lea.vmem %s0, %s160
      %p162 = pneg %p48
      %p163 = pneg %p45
      %s164 = smul.u32 2, %s18
      %p165 = scmp.lt.s32.totalorder %s17, 1
      %s166 = scalar_select %p165, %s17, 1
      %p167 = scmp.lt.s32.totalorder %s164, 1
      %s168 = scalar_select %p167, %s164, 1
      %s169 = smul.addr %s166, 2
      %s170 = sadd.s32 %s168, %s169
      %s171 = scalar_lea.vmem %s1, %s170
      %p172 = pneg %p76
      %p173 = pneg %p73
      %p174 = pneg %p102
      %p175 = pneg %p99
      %p176 = scmp.lt.s32.totalorder %s17, 1
      %s177 = scalar_select %p176, %s17, 1
      %s178 = smul.addr %s177, 8
      %s179 = scalar_lea.vmem %s2, %s178
      %s180 = smul.u32 2, %s18
      %p181 = scmp.lt.s32.totalorder %s17, 1
      %s182 = scalar_select %p181, %s17, 1
      %p183 = scmp.lt.s32.totalorder %s180, 1
      %s184 = scalar_select %p183, %s180, 1
      %s185 = smul.addr %s182, 2
      %s186 = sadd.s32 %s184, %s185
      %s187 = smul.addr %s186, 8
      %s188 = scalar_lea.vmem %s0, %s187
      %s189 = smul.u32 2, %s18
      %s190 = smul.u32 2, %s18
      %p191 = scmp.lt.s32.totalorder %s17, 1
      %s192 = scalar_select %p191, %s17, 1
      %p193 = scmp.lt.s32.totalorder %s190, 1
      %s194 = scalar_select %p193, %s190, 1
      %s195 = smul.addr %s192, 2
      %s196 = sadd.s32 %s194, %s195
      %s197 = scalar_lea.vmem %s1, %s196
      %s198 = smul.u32 2, %s18
      %p199 = scmp.lt.s32.totalorder %s17, 1
      %s200 = scalar_select %p199, %s17, 1
      %s201 = smul.addr %s200, 8
      %s202 = scalar_lea.vmem %s2, %s201
      %p203 = scmp.eq.s32.totalorder %s18, 0
      // Predicated region
      $region29: #{tpu_custom_call.1} parent=27 // pred_check
        %p204 = pneg %p203
      $region30: #{tpu_custom_call.1} parent=27 // pred_check_branch
        %206 = sbr.rel (%p204) target = $region32
      $region31: #{tpu_custom_call.1} parent=27 // pred_region
        %v207 = vlaneseq
        %v208 = vshrl.u32 %v207, 7
        %209 = vst [vmem:[#allocation2] sm:$0x1f] %v208
        %210 = vst [vmem:[#allocation2 + $0x8] sm:$0x1f] %v208
        %vm211 = vcmask 4096
        %212 = vst.msk [vmem:[#allocation3] sm:$0x1f] %vm211, 0
        %213 = vst.msk [vmem:[#allocation4] sm:$0x1f] %vm211, 0
        %214 = vst.msk [vmem:[#allocation5] sm:$0x1f] %vm211, 0
      $region32: #{tpu_custom_call.1} parent=27 // pred_fallthru
        _
      %v215 = vld [vmem:[%s188] sm:$0x1f]
      %v216 = vld [vmem:[%s188 + $0x8] sm:$0x1f]
      %v217 = vld [vmem:[%s197] sm:$0x3]
      %v218 = vld [vmem:[#allocation2] sm:$0x1f]
      %v219 = vld [vmem:[#allocation2 + $0x8] sm:$0x1f]
      %vm220 = vcmask 1044480
      %v221 = vsel %vm220, %v215, -inf
      %v222 = vrot.slane %v221, 4
      %v223 = vmax.f32 %v221, %v222
      %v224 = vrot.slane %v223, 2
      %v225 = vmax.f32 %v223, %v224
      %v226 = vrot.slane %v225, 1
      %v227 = vmax.f32 %v225, %v226
      %v228 = vsel %vm220, %v216, -inf
      %v229 = vrot.slane %v228, 4
      %v230 = vmax.f32 %v228, %v229
      %v231 = vrot.slane %v230, 2
      %v232 = vmax.f32 %v230, %v231
      %v233 = vrot.slane %v232, 1
      %v234 = vmax.f32 %v232, %v233
      %vm235 = vcmp.eq.f32.partialorder %v215, %v227
      %vm236 = vcmp.eq.f32.partialorder %v216, %v234
      %v237 = vsel %vm235, %v218, 5
      %v238 = vsel %vm236, %v219, 5
      %v239 = vsel %vm220, %v237, 2147483647
      %v240 = vrot.slane %v239, 4
      %vm241 = vcmp.lt.s32.totalorder %v239, %v240
      %v242 = vsel %vm241, %v239, %v240
      %v243 = vrot.slane %v242, 2
      %vm244 = vcmp.lt.s32.totalorder %v242, %v243
      %v245 = vsel %vm244, %v242, %v243
      %v246 = vrot.slane %v245, 1
      %vm247 = vcmp.lt.s32.totalorder %v245, %v246
      %v248 = vsel %vm247, %v245, %v246
      %v249 = vsel %vm220, %v238, 2147483647
      %v250 = vrot.slane %v249, 4
      %vm251 = vcmp.lt.s32.totalorder %v249, %v250
      %v252 = vsel %vm251, %v249, %v250
      %v253 = vrot.slane %v252, 2
      %vm254 = vcmp.lt.s32.totalorder %v252, %v253
      %v255 = vsel %vm254, %v252, %v253
      %v256 = vrot.slane %v255, 1
      %vm257 = vcmp.lt.s32.totalorder %v255, %v256
      %v258 = vsel %vm257, %v255, %v256
      %vm259 = vcmp.eq.s32.totalorder %v248, %v218
      %vm260 = vcmp.eq.s32.totalorder %v258, %v219
      %v261 = vperm.slane %v217, 0
      %v262 = vperm.slane %v217, 1
      %vm263 = vcmp.eq.s32.totalorder %v261, %v218
      %vm264 = vcmp.eq.s32.totalorder %v262, %v219
      %vm265 = vmand %vm259, %vm263
      %vm266 = vmand %vm260, %vm264
      %v267 = vld [vmem:[#allocation3] sm:$0x1f]
      %v268 = vsel %vm265, 1, 0
      %v269 = vsel %vm266, 1, 0
      %v270 = vcvt.s32.f32 %v268
      %v271 = vcvt.s32.f32 %v269
      %v272 = vsel %vm220, %v270, 0.0
      %v273 = vsel %vm220, %v271, 0.0
      %v274 = vadd.f32 %v272, %v273
      %275 = vadd.xlane.f32.xlu0 %v274
      %v276 = vpop.xlane.xlu0 %275
      %v277 = vcvt.f32.s32.to.zero.pseudo %v276
      %v278 = vadd.s32 %v267, %v277
      %vm279 = vcmask 4096
      %280 = vst.msk [vmem:[#allocation3] sm:$0x1f] %vm279, %v278
      %v281 = vld [vmem:[#allocation4] sm:$0x1f]
      %v282 = vsel %vm259, 1, 0
      %v283 = vsel %vm260, 1, 0
      %v284 = vcvt.s32.f32 %v282
      %v285 = vcvt.s32.f32 %v283
      %v286 = vsel %vm220, %v284, 0.0
      %v287 = vsel %vm220, %v285, 0.0
      %v288 = vadd.f32 %v286, %v287
      %289 = vadd.xlane.f32.xlu0 %v288
      %v290 = vpop.xlane.xlu0 %289
      %v291 = vcvt.f32.s32.to.zero.pseudo %v290
      %v292 = vadd.s32 %v281, %v291
      %293 = vst.msk [vmem:[#allocation4] sm:$0x1f] %vm279, %v292
      %v294 = vld [vmem:[#allocation5] sm:$0x1f]
      %v295 = vsel %vm263, 1, 0
      %v296 = vsel %vm264, 1, 0
      %v297 = vcvt.s32.f32 %v295
      %v298 = vcvt.s32.f32 %v296
      %v299 = vsel %vm220, %v297, 0.0
      %v300 = vsel %vm220, %v298, 0.0
      %v301 = vadd.f32 %v299, %v300
      %302 = vadd.xlane.f32.xlu0 %v301
      %v303 = vpop.xlane.xlu0 %302
      %v304 = vcvt.f32.s32.to.zero.pseudo %v303
      %v305 = vadd.s32 %v294, %v304
      %306 = vst.msk [vmem:[#allocation5] sm:$0x1f] %vm279, %v305
      // Predicated region
      $region33: #{tpu_custom_call.1} parent=27 // pred_check
        %p307 = pneg %p203
      $region34: #{tpu_custom_call.1} parent=27 // pred_check_branch
        %309 = sbr.rel (%p307) target = $region36
      $region35: #{tpu_custom_call.1} parent=27 // pred_region
        %v310 = vld [vmem:[#allocation3] sm:$0x1f]
        %v311 = vld [vmem:[#allocation4] sm:$0x1f]
        %v312 = vld [vmem:[#allocation5] sm:$0x1f]
        %313 = vrot.lane.b32.xlu0 %v311, 1
        %v314 = vpop.permute.xlu0 %313
        %315 = vrot.lane.b32.xlu0 %v312, 2
        %v316 = vpop.permute.xlu0 %315
        %vm317 = vcmask 7168
        %v318 = vsel %vm317, %v310, %v314
        %vm319 = vcmask 15360
        %v320 = vsel %vm319, %v318, %v316
        %vm321 = vcmask 20480
        %322 = vst.msk [vmem:[%s202] sm:$0x1f] %vm321, %v320
      $region36: #{tpu_custom_call.1} parent=27 // pred_fallthru
        _
      %p323 = scmp.lt.s32.totalorder %s17, 1
      %s324 = scalar_select %p323, %s17, 1
      %s325 = smul.addr %s324, 8
      %s326 = scalar_lea.vmem %s2, %s325
      // Predicated region
      $region37: #{tpu_custom_call.1} parent=27 // pred_check
        %p327 = pneg %p99
      $region38: #{tpu_custom_call.1} parent=27 // pred_check_branch
        %329 = sbr.rel (%p327) target = $region40
      $region39: #{tpu_custom_call.1} parent=27 // pred_region
        _
      $region40: #{tpu_custom_call.1} parent=27 // pred_fallthru
        _
    $region28: #{tpu_custom_call.1} parent=5 // pred_fallthru
      _
    %p330 = scmp.le.s32.totalorder 2, %s8
    // Predicated region
    $region41: #{tpu_custom_call.1} parent=5 // pred_check
      %p331 = pneg %p330
    $region42: #{tpu_custom_call.1} parent=5 // pred_check_branch
      %333 = sbr.rel (%p331) target = $region44
    $region43: #{tpu_custom_call.1} parent=5 // pred_region
      %s334 = ssub.s32 %s8, 2
      // Predicated region
      $region45: #{tpu_custom_call.1} parent=43 // pred_check
        %p335 = pneg %p105
      $region46: #{tpu_custom_call.1} parent=43 // pred_check_branch
        %337 = sbr.rel (%p335) target = $region48
      $region47: #{tpu_custom_call.1} parent=43 // pred_region
        %p338 = scmp.lt.s32.totalorder %s19, 1
        %s339 = scalar_select %p338, %s19, 1
        %s340 = smul.addr %s339, 8
        %s341 = scalar_lea.vmem %s2, %s340
      $region48: #{tpu_custom_call.1} parent=43 // pred_fallthru
        _
    $region44: #{tpu_custom_call.1} parent=5 // pred_fallthru
      _
  $region6: #{tpu_custom_call.1} parent=0 // loop_footer
    %s12 = sadd.s32 1, %s8
  $region7: #{tpu_custom_call.1} parent=0 // loop_footer_branch
    %7 = sbr.rel target = $region3
  $region8: #{tpu_custom_call.1} parent=0 // loop_exit
    _

</llo_original>
